<compile_context>
chip_gen: v5e
topology: v5e:2x2
jax: 0.10.0
libtpu: 0.0.40
codegen_flags: <defaults>
</compile_context>

<pallas_src>
from functools import lru_cache, partial

import numpy as np
import jax
import jax.numpy as jnp
from jax.experimental import pallas as pl
from jax.experimental.pallas import tpu as pltpu


# ----------------------------- kernels -------------------------------------- #
def _kernel_im(x_ref, wim_ref, o_ref):
    """Even-n fast path: Re(analytic) == x, single matmul."""
    x = x_ref[...]
    x32 = x.astype(jnp.float32)
    im = jnp.dot(x.astype(jnp.bfloat16), wim_ref[...],
                 preferred_element_type=jnp.float32)
    o_ref[...] = jnp.sqrt(x32 * x32 + im * im).astype(o_ref.dtype)


def _kernel_full(x_ref, wrd_ref, wim_ref, o_ref):
    """General path: Re = x + x @ (W_re - I), Im = x @ W_im."""
    x = x_ref[...]
    x32 = x.astype(jnp.float32)
    xb = x.astype(jnp.bfloat16)
    re = x32 + jnp.dot(xb, wrd_ref[...], preferred_element_type=jnp.float32)
    im = jnp.dot(xb, wim_ref[...], preferred_element_type=jnp.float32)
    o_ref[...] = jnp.sqrt(re * re + im * im).astype(o_ref.dtype)


def _kernel_im_ksplit(x_ref, wim_ref, o_ref, im_ref):
    """Even-n path with a K reduction axis (weights streamed as (tk, L) blocks)."""
    k = pl.program_id(1)

    @pl.when(k == 0)
    def _():
        im_ref[...] = jnp.zeros_like(im_ref)

    tk = wim_ref.shape[0]
    off = pl.multiple_of(k * tk, tk)
    xk = x_ref[:, pl.ds(off, tk)].astype(jnp.bfloat16)
    im_ref[...] += jnp.dot(xk, wim_ref[...], preferred_element_type=jnp.float32)

    @pl.when(k == pl.num_programs(1) - 1)
    def _():
        x32 = x_ref[...].astype(jnp.float32)
        im = im_ref[...]
        o_ref[...] = jnp.sqrt(x32 * x32 + im * im).astype(o_ref.dtype)


def _kernel_full_ksplit(x_ref, wrd_ref, wim_ref, o_ref, re_ref, im_ref):
    """General path with a K reduction axis."""
    k = pl.program_id(1)

    @pl.when(k == 0)
    def _():
        re_ref[...] = jnp.zeros_like(re_ref)
        im_ref[...] = jnp.zeros_like(im_ref)

    tk = wim_ref.shape[0]
    off = pl.multiple_of(k * tk, tk)
    xk = x_ref[:, pl.ds(off, tk)].astype(jnp.bfloat16)
    re_ref[...] += jnp.dot(xk, wrd_ref[...], preferred_element_type=jnp.float32)
    im_ref[...] += jnp.dot(xk, wim_ref[...], preferred_element_type=jnp.float32)

    @pl.when(k == pl.num_programs(1) - 1)
    def _():
        re = x_ref[...].astype(jnp.float32) + re_ref[...]
        im = im_ref[...]
        o_ref[...] = jnp.sqrt(re * re + im * im).astype(o_ref.dtype)


# ----------------------------- host-side helpers ----------------------------- #
def _cdiv(a: int, b: int) -> int:
    return -(-a // b)


def _round_up(v: int, m: int) -> int:
    return _cdiv(v, m) * m


@lru_cache(maxsize=None)
def _hilbert_filter_matrix(n: int):
    """(W_re - I, W_im, re_is_identity), with v_row = y_row @ (W_re + i*W_im)."""
    k = np.arange(n)
    dft = np.exp(-2j * np.pi * np.outer(k, k) / n)
    idft = np.exp(2j * np.pi * np.outer(k, k) / n) / n
    h = np.ones(n, dtype=np.float64)
    h[n // 2 + 1:] = 0.0            # exactly the torch masking / scaling
    h[1:n // 2] *= 2.0
    m = idft @ (h[:, None] * dft)
    re_is_identity = bool(np.allclose(m.real, np.eye(n), atol=1e-8))
    w_re_delta = np.ascontiguousarray((m.real - np.eye(n)).T)
    w_im = np.ascontiguousarray(m.imag.T)
    return w_re_delta, w_im, re_is_identity


@lru_cache(maxsize=None)
def _packed_weight(n: int, which: str, fold: int, L: int) -> np.ndarray:
    """Zero-padded block-diagonal (L, L) packing of the per-row (n, n) weight."""
    w_re_delta, w_im, _ = _hilbert_filter_matrix(n)
    w = w_re_delta if which == "re_delta" else w_im
    out = np.zeros((L, L), dtype=np.float32)
    for f in range(fold):
        out[f * n:(f + 1) * n, f * n:(f + 1) * n] = w
    return out


def _fold_layout(n: int):
    """(fold, L): pack `fold` rows of length n into one lane-dense row of width L."""
    if n >= 256:
        return 1, _round_up(n, 128)
    return max(1, 256 // n), 256


def _choose_tm(frows: int, tm_max: int, row_mult: int) -> int:
    tm_max = max(row_mult, (tm_max // row_mult) * row_mult)
    if frows <= 2 * row_mult:
        return min(frows, tm_max)            # single (full-extent) row block
    steps = _cdiv(frows, tm_max)
    if steps < 2:                            # let v7x's two TCs share the grid
        steps = 2
    elif steps % 2:                          # even split across the two TCs
        steps += 1
    return max(row_mult, min(tm_max, _round_up(_cdiv(frows, steps), row_mult)))


def _vmem_capacity() -> int:
    try:
        return int(pltpu.get_tpu_info().vmem_capacity_bytes)
    except Exception:
        return 64 << 20                      # conservative (v7x per-TC VMEM)


def _resident_spec(shape, index_map):
    """Single-buffered resident block (constant index_map -> fetched once)."""
    try:
        return pl.BlockSpec(shape, index_map, pipeline_mode=pl.Buffered(1))
    except Exception:
        return pl.BlockSpec(shape, index_map)


# ----------------------------- public wrapper -------------------------------- #
@partial(jax.jit,
         static_argnames=("concat_oscil", "tm", "max_resident_weight_bytes",
                          "k_tile"))
def hilbert_envelope(x, concat_oscil: bool = False, tm: int = 512,
                     max_resident_weight_bytes=None, k_tile=None):
    """abs(hilbert_transform(x)) along the last axis (NCHW); optional channel concat."""
    orig_shape = x.shape
    n = int(orig_shape[-1])
    rows = int(np.prod(orig_shape[:-1]))
    isz = int(x.dtype.itemsize)
    row_mult = 8 if isz >= 4 else 16

    fold, L = _fold_layout(n)
    frows = _cdiv(rows, fold)
    rows_pad = frows * fold

    _, _, re_is_identity = _hilbert_filter_matrix(n)
    w_names = ("im",) if re_is_identity else ("re_delta", "im")
    weights = tuple(jnp.asarray(_packed_weight(n, w, fold, L), dtype=jnp.bfloat16)
                    for w in w_names)
    n_w = len(weights)

    # ---- lane-dense packed input (pads/reshapes fuse under jit; the common
    #      divisor case needs no pad at all) ----
    x2d = x.reshape(rows, n)
    if rows_pad != rows:
        x2d = jnp.pad(x2d, ((0, rows_pad - rows), (0, 0)))
    xp = x2d.reshape(frows, fold * n)
    if fold * n != L:
        xp = jnp.pad(xp, ((0, 0), (0, L - fold * n)))

    # ---- generation-aware VMEM budgeting ----
    cap = _vmem_capacity()
    budget = int(cap * 0.80)
    if max_resident_weight_bytes is None:
        max_resident_weight_bytes = budget // 2
    w_resident = n_w * L * L * 2                     # bf16, single-buffered
    use_ksplit = w_resident > max_resident_weight_bytes

    tm_eff = _choose_tm(frows, tm, row_mult)

    if not use_ksplit:
        def footprint(t):
            return 4 * t * L * isz + w_resident      # 2x in + 2x out buffers
    else:
        if k_tile is None:
            tk = next(t for t in (512, 256, 128) if L % t == 0)
        else:
            tk = min(int(k_tile), L)
            if L % tk:
                raise ValueError(f"k_tile={tk} must divide packed width L={L}")

        def footprint(t):
            return (4 * t * L * isz                  # in + out, double-buffered
                    + n_w * t * L * 4                # f32 accumulators
                    + 2 * n_w * tk * L * 2)          # streamed bf16 weight blocks

    while tm_eff > row_mult and footprint(tm_eff) > budget:
        tm_eff = max(row_mult, _round_up(tm_eff // 2, row_mult))
    fp = footprint(tm_eff)
    vmem_limit = int(min(int(cap * 0.875), max(fp + (4 << 20), 32 << 20)))

    out_shape = jax.ShapeDtypeStruct((frows, L), x.dtype)

    if not use_ksplit:
        kernel = _kernel_im if re_is_identity else _kernel_full
        in_specs = [pl.BlockSpec((tm_eff, L), lambda i: (i, 0))]
        in_specs += [_resident_spec((L, L), lambda i: (0, 0)) for _ in range(n_w)]
        out = pl.pallas_call(
            kernel,
            out_shape=out_shape,
            grid_spec=pltpu.PrefetchScalarGridSpec(
                num_scalar_prefetch=0,
                grid=(_cdiv(frows, tm_eff),),
                in_specs=in_specs,
                out_specs=pl.BlockSpec((tm_eff, L), lambda i: (i, 0)),
            ),
            compiler_params=pltpu.CompilerParams(
                dimension_semantics=("parallel",),
                vmem_limit_bytes=vmem_limit),
        )(xp, *weights)
    else:
        kernel = _kernel_im_ksplit if re_is_identity else _kernel_full_ksplit
        in_specs = [pl.BlockSpec((tm_eff, L), lambda i, k: (i, 0))]
        in_specs += [pl.BlockSpec((tk, L), lambda i, k: (k, 0)) for _ in range(n_w)]
        scratch = [pltpu.VMEM((tm_eff, L), jnp.float32) for _ in range(n_w)]
        out = pl.pallas_call(
            kernel,
            out_shape=out_shape,
            grid_spec=pltpu.PrefetchScalarGridSpec(
                num_scalar_prefetch=0,
                grid=(_cdiv(frows, tm_eff), L // tk),
                in_specs=in_specs,
                out_specs=pl.BlockSpec((tm_eff, L), lambda i, k: (i, 0)),
                scratch_shapes=scratch,
            ),
            compiler_params=pltpu.CompilerParams(
                dimension_semantics=("parallel", "arbitrary"),
                vmem_limit_bytes=vmem_limit),
        )(xp, *weights)

    env = out[:, :fold * n].reshape(rows_pad, n)[:rows].reshape(orig_shape)
    if concat_oscil:
        return jnp.concatenate([env, x], axis=1)   # channel concat, like torch
    return env


# ----------------------------- reference + main ------------------------------ #
def _hilbert_ref(x):
    """Pure-JAX reference mirroring the torch implementation exactly."""
    n = x.shape[-1]
    f = jnp.fft.fft(x.astype(jnp.float32), axis=-1)
    h = np.ones(n, dtype=np.float32)
    h[n // 2 + 1:] = 0.0
    h[1:n // 2] *= 2.0
    f = f * jnp.asarray(h, dtype=f.dtype)
    return jnp.abs(jnp.fft.ifft(f, axis=-1))


if __name__ == "__main__":
    key = jax.random.PRNGKey(0)
    x = jax.random.normal(key, (2, 4, 16, 16), dtype=jnp.float32)   # NCHW
    ref = _hilbert_ref(x)

    # 1) even-n fast path (Re == x), lane-dense fold to L=256, weights resident.
    y = jax.block_until_ready(hilbert_envelope(x))
    assert y.shape == x.shape and y.dtype == x.dtype
    np.testing.assert_allclose(np.asarray(y), np.asarray(ref), rtol=2e-2, atol=2e-2)

    # 2) channel-concat branch (dim=1), like the torch module.
    y_cat = jax.block_until_ready(hilbert_envelope(x, concat_oscil=True))
    assert y_cat.shape == (2, 8, 16, 16)
    np.testing.assert_allclose(np.asarray(y_cat[:, 4:]), np.asarray(x), rtol=0, atol=0)

    # 3) odd n (non-identity real part) + non-divisor lane packing (n=15 -> L=256).
    x2 = jax.random.normal(jax.random.PRNGKey(1), (2, 3, 8, 15), dtype=jnp.float32)
    y2 = jax.block_until_ready(hilbert_envelope(x2))
    np.testing.assert_allclose(np.asarray(y2), np.asarray(_hilbert_ref(x2)),
                               rtol=2e-2, atol=2e-2)

    # 4) K-split (reduction grid axis) path, forced on small shapes so it is
    #    compiled and checked here too (normally only triggers for large n).
    y3 = jax.block_until_ready(
        hilbert_envelope(x, max_resident_weight_bytes=1, k_tile=128))
    np.testing.assert_allclose(np.asarray(y3), np.asarray(ref), rtol=2e-2, atol=2e-2)
    y4 = jax.block_until_ready(
        hilbert_envelope(x2, max_resident_weight_bytes=1, k_tile=128))
    np.testing.assert_allclose(np.asarray(y4), np.asarray(_hilbert_ref(x2)),
                               rtol=2e-2, atol=2e-2)

    print("KERNEL_OK")
</pallas_src>

<mosaic_0001>
module attributes {stable_mosaic.version = 11 : i64} {
  func.func @_kernel_im(%arg0: i32, %arg1: memref<8x256xf32, #tpu.memory_space<vmem>>, %arg2: memref<256x256xbf16, #tpu.memory_space<vmem>>, %arg3: memref<8x256xf32, #tpu.memory_space<vmem>>) attributes {dimension_semantics = [#tpu.dimension_semantics<parallel>], iteration_bounds = array<i64: 1>, scalar_prefetch = 0 : i64, scratch_operands = 0 : i64, tpu.core_type = #tpu.core_type<tc>, window_params = [{transform_indices = @transform_0, window_bounds = array<i64: 8, 256>}, {pipeline_mode = #tpu.pipeline_mode<synchronous>, transform_indices = @transform_1, window_bounds = array<i64: 256, 256>}, {transform_indices = @transform_2, window_bounds = array<i64: 8, 256>}]} {
    %c0 = arith.constant 0 : index
    %c0_0 = arith.constant 0 : index
    %0 = vector.load %arg1[%c0, %c0_0] : memref<8x256xf32, #tpu.memory_space<vmem>>, vector<8x256xf32>
    %1 = arith.truncf %0 : vector<8x256xf32> to vector<8x256xbf16>
    %c0_1 = arith.constant 0 : index
    %c0_2 = arith.constant 0 : index
    %2 = vector.load %arg2[%c0_1, %c0_2] : memref<256x256xbf16, #tpu.memory_space<vmem>>, vector<256x256xbf16>
    %cst = arith.constant dense<0.000000e+00> : vector<8x256xf32>
    %3 = tpu.matmul %1, %2, %cst {dimension_numbers = #tpu.dot_dimension_numbers<[1], [0], [0], [1], [0, 0, 1, 1], [], []>} : vector<8x256xbf16>, vector<256x256xbf16>, vector<8x256xf32> -> vector<8x256xf32>
    %4 = arith.mulf %0, %0 : vector<8x256xf32>
    %5 = arith.mulf %3, %3 : vector<8x256xf32>
    %6 = arith.addf %4, %5 : vector<8x256xf32>
    %7 = math.sqrt %6 : vector<8x256xf32>
    %c0_3 = arith.constant 0 : index
    %c0_4 = arith.constant 0 : index
    %8 = vector.load %arg3[%c0_3, %c0_4] : memref<8x256xf32, #tpu.memory_space<vmem>>, vector<8x256xf32>
    tpu.vector_store %arg3[%c0_3, %c0_4], %7 {strides = array<i32>} : memref<8x256xf32, #tpu.memory_space<vmem>>, vector<8x256xf32>,
    return
  }
  func.func @transform_0(%arg0: i32) -> (i32, i32) {
    %c0_i32 = arith.constant 0 : i32
    %c0_i32_0 = arith.constant 0 : i32
    return %arg0, %c0_i32 : i32, i32
  }
  func.func @transform_1(%arg0: i32) -> (i32, i32) {
    %c0_i32 = arith.constant 0 : i32
    %c0_i32_0 = arith.constant 0 : i32
    %c0_i32_1 = arith.constant 0 : i32
    return %c0_i32, %c0_i32_0 : i32, i32
  }
  func.func @transform_2(%arg0: i32) -> (i32, i32) {
    %c0_i32 = arith.constant 0 : i32
    %c0_i32_0 = arith.constant 0 : i32
    return %arg0, %c0_i32 : i32, i32
  }
}

</mosaic_0001>

<llo_original>
// kernel: hilbert_envelope.1
$region0: #{hilbert_envelope.1}
  #allocation0 [shape = 'u32[]', space=smem, size = 0x4, offset = 0x4, fixed_abs, tag = 'smem constant byte address 0x4 - core index']
  #allocation1 [shape = 'u32[72,128]{1,0:T(1,128)}', space=vmem, size = 0x9000, scoped, tag = 'internal scratch']
  %s0 = inlined_call_operand.vmem [shape: f32[8,256], index: 0, kind: input, shape index: {}]
  %s1 = inlined_call_operand.hbm [shape: bf16[256,256], index: 1, kind: input, shape index: {}]
  %s2 = inlined_call_operand.vmem [shape: f32[8,256], index: 2, kind: output, shape index: {}]
  %s3 = sld [smem:[#allocation0]]
  $region22: #{hilbert_envelope.1} parent=0
    _
  %s5 = ssub.s32 1, %s3
  %s6 = scalar_select 0, %s5, %s3
  $region1: #{hilbert_envelope.1} parent=0
    #allocation2 [shape = 'u8[131072]{0}', space=vmem, size = 0x20000, scoped, tag = 'input window, operand 1, single buffered']
    #allocation3 [shape = 's32[1]{0}', space=sflag, size = 0x4, scoped, tag = 'scoped memory for hilbert_envelope.1']
    %7 = vsyncpa [#allocation3], 0
    // Predicated region
    $region2: #{hilbert_envelope.1} parent=1 // pred_check
      _
    $region3: #{hilbert_envelope.1} parent=1 // pred_check_branch
      %9 = sbr.rel (0) target = $region5
    $region4: #{hilbert_envelope.1} parent=1 // pred_region
      _
    $region5: #{hilbert_envelope.1} parent=1 // pred_fallthru
      _
    // Predicated region
    $region6: #{hilbert_envelope.1} parent=1 // pred_check
      _
    $region7: #{hilbert_envelope.1} parent=1 // pred_check_branch
      %11 = sbr.rel (0) target = $region9
    $region8: #{hilbert_envelope.1} parent=1 // pred_region
      %13 = vsyncadd [#allocation3], 0
      %s14 = sshll.u32 %s1, 4
      %s15 = int_to_ptr.hbm [resolvable:$true] %s14
      %s16 = sshll.u32 [#allocation2], 4
      %s17 = int_to_ptr.vmem [resolvable:$true] %s16
      %22 = dma.hbm_to_vmem [thread:$0]  %s15, 4096, %s17, [#allocation3], 128, 128, 8
    $region9: #{hilbert_envelope.1} parent=1 // pred_fallthru
      _
    // Predicated region
    $region10: #{hilbert_envelope.1} parent=1 // pred_check
      _
    $region11: #{hilbert_envelope.1} parent=1 // pred_check_branch
      %24 = sbr.rel (0) target = $region13
    $region12: #{hilbert_envelope.1} parent=1 // pred_region
      %26 = dma.done [#allocation3], 4096
    $region13: #{hilbert_envelope.1} parent=1 // pred_fallthru
      _
    %v27 = vld [vmem:[%s0] sm:$0xff]
    %v28 = vld [vmem:[%s0 + $0x8] sm:$0xff]
    %v29 = vpack.c.bf16 %v27, %v27
    %v30 = vpack.c.bf16 %v28, %v28
    %v31 = vld [vmem:[#allocation2] sm:$0xff]
    %v32 = vld [vmem:[#allocation2 + $0x8] sm:$0xff]
    %v33 = vld [vmem:[#allocation2 + $0x10] sm:$0xff]
    %v34 = vld [vmem:[#allocation2 + $0x18] sm:$0xff]
    %v35 = vld [vmem:[#allocation2 + $0x20] sm:$0xff]
    %v36 = vld [vmem:[#allocation2 + $0x28] sm:$0xff]
    %v37 = vld [vmem:[#allocation2 + $0x30] sm:$0xff]
    %v38 = vld [vmem:[#allocation2 + $0x38] sm:$0xff]
    %v39 = vld [vmem:[#allocation2 + $0x40] sm:$0xff]
    %v40 = vld [vmem:[#allocation2 + $0x48] sm:$0xff]
    %v41 = vld [vmem:[#allocation2 + $0x50] sm:$0xff]
    %v42 = vld [vmem:[#allocation2 + $0x58] sm:$0xff]
    %v43 = vld [vmem:[#allocation2 + $0x60] sm:$0xff]
    %v44 = vld [vmem:[#allocation2 + $0x68] sm:$0xff]
    %v45 = vld [vmem:[#allocation2 + $0x70] sm:$0xff]
    %v46 = vld [vmem:[#allocation2 + $0x78] sm:$0xff]
    %v47 = vld [vmem:[#allocation2 + $0x80] sm:$0xff]
    %v48 = vld [vmem:[#allocation2 + $0x88] sm:$0xff]
    %v49 = vld [vmem:[#allocation2 + $0x90] sm:$0xff]
    %v50 = vld [vmem:[#allocation2 + $0x98] sm:$0xff]
    %v51 = vld [vmem:[#allocation2 + $0xa0] sm:$0xff]
    %v52 = vld [vmem:[#allocation2 + $0xa8] sm:$0xff]
    %v53 = vld [vmem:[#allocation2 + $0xb0] sm:$0xff]
    %v54 = vld [vmem:[#allocation2 + $0xb8] sm:$0xff]
    %v55 = vld [vmem:[#allocation2 + $0xc0] sm:$0xff]
    %v56 = vld [vmem:[#allocation2 + $0xc8] sm:$0xff]
    %v57 = vld [vmem:[#allocation2 + $0xd0] sm:$0xff]
    %v58 = vld [vmem:[#allocation2 + $0xd8] sm:$0xff]
    %v59 = vld [vmem:[#allocation2 + $0xe0] sm:$0xff]
    %v60 = vld [vmem:[#allocation2 + $0xe8] sm:$0xff]
    %v61 = vld [vmem:[#allocation2 + $0xf0] sm:$0xff]
    %v62 = vld [vmem:[#allocation2 + $0xf8] sm:$0xff]
    %v95 = vunpack.c.l.b16 %v31
    %v96 = vunpack.c.h.b16 %v31
    %v97 = vunpack.c.l.b16 %v32
    %v98 = vunpack.c.h.b16 %v32
    %v99 = vunpack.c.l.b16 %v33
    %v100 = vunpack.c.h.b16 %v33
    %v101 = vunpack.c.l.b16 %v34
    %v102 = vunpack.c.h.b16 %v34
    %v103 = vunpack.c.l.b16 %v35
    %v104 = vunpack.c.h.b16 %v35
    %v105 = vunpack.c.l.b16 %v36
    %v106 = vunpack.c.h.b16 %v36
    %v107 = vunpack.c.l.b16 %v37
    %v108 = vunpack.c.h.b16 %v37
    %v109 = vunpack.c.l.b16 %v38
    %v110 = vunpack.c.h.b16 %v38
    %v111 = vunpack.c.l.b16 %v39
    %v112 = vunpack.c.h.b16 %v39
    %v113 = vunpack.c.l.b16 %v40
    %v114 = vunpack.c.h.b16 %v40
    %v115 = vunpack.c.l.b16 %v41
    %v116 = vunpack.c.h.b16 %v41
    %v117 = vunpack.c.l.b16 %v42
    %v118 = vunpack.c.h.b16 %v42
    %v119 = vunpack.c.l.b16 %v43
    %v120 = vunpack.c.h.b16 %v43
    %v121 = vunpack.c.l.b16 %v44
    %v122 = vunpack.c.h.b16 %v44
    %v123 = vunpack.c.l.b16 %v45
    %v124 = vunpack.c.h.b16 %v45
    %v125 = vunpack.c.l.b16 %v46
    %v126 = vunpack.c.h.b16 %v46
    %v127 = vunpack.c.l.b16 %v47
    %v128 = vunpack.c.h.b16 %v47
    %v129 = vunpack.c.l.b16 %v48
    %v130 = vunpack.c.h.b16 %v48
    %v131 = vunpack.c.l.b16 %v49
    %v132 = vunpack.c.h.b16 %v49
    %v133 = vunpack.c.l.b16 %v50
    %v134 = vunpack.c.h.b16 %v50
    %v135 = vunpack.c.l.b16 %v51
    %v136 = vunpack.c.h.b16 %v51
    %v137 = vunpack.c.l.b16 %v52
    %v138 = vunpack.c.h.b16 %v52
    %v139 = vunpack.c.l.b16 %v53
    %v140 = vunpack.c.h.b16 %v53
    %v141 = vunpack.c.l.b16 %v54
    %v142 = vunpack.c.h.b16 %v54
    %v143 = vunpack.c.l.b16 %v55
    %v144 = vunpack.c.h.b16 %v55
    %v145 = vunpack.c.l.b16 %v56
    %v146 = vunpack.c.h.b16 %v56
    %v147 = vunpack.c.l.b16 %v57
    %v148 = vunpack.c.h.b16 %v57
    %v149 = vunpack.c.l.b16 %v58
    %v150 = vunpack.c.h.b16 %v58
    %v151 = vunpack.c.l.b16 %v59
    %v152 = vunpack.c.h.b16 %v59
    %v153 = vunpack.c.l.b16 %v60
    %v154 = vunpack.c.h.b16 %v60
    %v155 = vunpack.c.l.b16 %v61
    %v156 = vunpack.c.h.b16 %v61
    %v157 = vunpack.c.l.b16 %v62
    %v158 = vunpack.c.h.b16 %v62
    %v159 = vpack.c.b16 %v97, %v95
    %v160 = vpack.c.b16 %v98, %v96
    %v161 = vpack.c.b16 %v101, %v99
    %v162 = vpack.c.b16 %v102, %v100
    %v163 = vpack.c.b16 %v105, %v103
    %v164 = vpack.c.b16 %v106, %v104
    %v165 = vpack.c.b16 %v109, %v107
    %v166 = vpack.c.b16 %v110, %v108
    %v167 = vpack.c.b16 %v113, %v111
    %v168 = vpack.c.b16 %v114, %v112
    %v169 = vpack.c.b16 %v117, %v115
    %v170 = vpack.c.b16 %v118, %v116
    %v171 = vpack.c.b16 %v121, %v119
    %v172 = vpack.c.b16 %v122, %v120
    %v173 = vpack.c.b16 %v125, %v123
    %v174 = vpack.c.b16 %v126, %v124
    %v175 = vpack.c.b16 %v129, %v127
    %v176 = vpack.c.b16 %v130, %v128
    %v177 = vpack.c.b16 %v133, %v131
    %v178 = vpack.c.b16 %v134, %v132
    %v179 = vpack.c.b16 %v137, %v135
    %v180 = vpack.c.b16 %v138, %v136
    %v181 = vpack.c.b16 %v141, %v139
    %v182 = vpack.c.b16 %v142, %v140
    %v183 = vpack.c.b16 %v145, %v143
    %v184 = vpack.c.b16 %v146, %v144
    %v185 = vpack.c.b16 %v149, %v147
    %v186 = vpack.c.b16 %v150, %v148
    %v187 = vpack.c.b16 %v153, %v151
    %v188 = vpack.c.b16 %v154, %v152
    %v189 = vpack.c.b16 %v157, %v155
    %v190 = vpack.c.b16 %v158, %v156
    %223 = vmatpush.bf16.msra.mxu0 %v173
    %224 = vmatpush.bf16.msra.mxu0 %v171
    %225 = vmatpush.bf16.msra.mxu0 %v169
    %226 = vmatpush.bf16.msra.mxu0 %v167
    %227 = vmatpush.bf16.msra.mxu0 %v165
    %228 = vmatpush.bf16.msra.mxu0 %v163
    %229 = vmatpush.bf16.msra.mxu0 %v161
    %230 = vmatpush.bf16.msra.mxu0 %v159
    %231 = vmatmul.bf16.gmra.mxu0 %v29
    %v232 = vpop.f32.mrf.mxu0
    %v233 = vadd.f32 0.0, %v232
    %v234 = vpop.f32.mrf.mxu0
    %235 = vdwg.mxu0
    %236 = vmatpush.bf16.msra.mxu0 %v189
    %237 = vmatpush.bf16.msra.mxu0 %v187
    %238 = vmatpush.bf16.msra.mxu0 %v185
    %239 = vmatpush.bf16.msra.mxu0 %v183
    %240 = vmatpush.bf16.msra.mxu0 %v181
    %241 = vmatpush.bf16.msra.mxu0 %v179
    %242 = vmatpush.bf16.msra.mxu0 %v177
    %243 = vmatpush.bf16.msra.mxu0 %v175
    %244 = vmatmul.bf16.gmra.mxu0 %v30
    %v245 = vpop.f32.mrf.mxu0
    %v246 = vadd.f32 %v233, %v245
    %v247 = vpop.f32.mrf.mxu0
    %248 = vdwg.mxu0
    %249 = vmatpush.bf16.msra.mxu0 %v174
    %250 = vmatpush.bf16.msra.mxu0 %v172
    %251 = vmatpush.bf16.msra.mxu0 %v170
    %252 = vmatpush.bf16.msra.mxu0 %v168
    %253 = vmatpush.bf16.msra.mxu0 %v166
    %254 = vmatpush.bf16.msra.mxu0 %v164
    %255 = vmatpush.bf16.msra.mxu0 %v162
    %256 = vmatpush.bf16.msra.mxu0 %v160
    %257 = vmatmul.bf16.gmra.mxu0 %v29
    %v258 = vpop.f32.mrf.mxu0
    %v259 = vadd.f32 0.0, %v258
    %v260 = vpop.f32.mrf.mxu0
    %261 = vdwg.mxu0
    %262 = vmatpush.bf16.msra.mxu0 %v190
    %263 = vmatpush.bf16.msra.mxu0 %v188
    %264 = vmatpush.bf16.msra.mxu0 %v186
    %265 = vmatpush.bf16.msra.mxu0 %v184
    %266 = vmatpush.bf16.msra.mxu0 %v182
    %267 = vmatpush.bf16.msra.mxu0 %v180
    %268 = vmatpush.bf16.msra.mxu0 %v178
    %269 = vmatpush.bf16.msra.mxu0 %v176
    %270 = vmatmul.bf16.gmra.mxu0 %v30
    %v271 = vpop.f32.mrf.mxu0
    %v272 = vadd.f32 %v259, %v271
    %v273 = vpop.f32.mrf.mxu0
    %274 = vdwg.mxu0
    %v275 = vmul.f32 %v27, %v27
    %v276 = vmul.f32 %v28, %v28
    %v277 = vmul.f32 %v246, %v246
    %v278 = vmul.f32 %v272, %v272
    %v279 = vadd.f32 %v275, %v277
    %v280 = vadd.f32 %v276, %v278
    %v281 = vrsqrt.pop %v279
    %v282 = vmul.f32 %v281, %v279
    %v283 = vmul.f32 %v282, %v281
    %v284 = vmul.f32 0.5, %v283
    %v285 = vsub.f32 1.5, %v284
    %v286 = vmul.f32 %v281, %v285
    %v287 = vmul.f32 %v279, %v286
    %vm288 = vcmp.eq.f32.partialorder %v279, inf
    %v289 = vsel %vm288, %v279, %v287
    %vm290 = vcmp.eq.f32.partialorder %v279, 0.0
    %v291 = vand.u32 %v279, 2147483648
    %v292 = vsel %vm290, %v291, %v289
    %v293 = vrsqrt.pop %v280
    %v294 = vmul.f32 %v293, %v280
    %v295 = vmul.f32 %v294, %v293
    %v296 = vmul.f32 0.5, %v295
    %v297 = vsub.f32 1.5, %v296
    %v298 = vmul.f32 %v293, %v297
    %v299 = vmul.f32 %v280, %v298
    %vm300 = vcmp.eq.f32.partialorder %v280, inf
    %v301 = vsel %vm300, %v280, %v299
    %vm302 = vcmp.eq.f32.partialorder %v280, 0.0
    %v303 = vand.u32 %v280, 2147483648
    %v304 = vsel %vm302, %v303, %v301
    %305 = vst [vmem:[%s2] sm:$0xff] %v292
    %306 = vst [vmem:[%s2 + $0x8] sm:$0xff] %v304
    // Predicated region
    $region14: #{hilbert_envelope.1} parent=1 // pred_check
      _
    $region15: #{hilbert_envelope.1} parent=1 // pred_check_branch
      %308 = sbr.rel (0) target = $region17
    $region16: #{hilbert_envelope.1} parent=1 // pred_region
      _
    $region17: #{hilbert_envelope.1} parent=1 // pred_fallthru
      _
    // Predicated region
    $region18: #{hilbert_envelope.1} parent=1 // pred_check
      _
    $region19: #{hilbert_envelope.1} parent=1 // pred_check_branch
      %310 = sbr.rel (0) target = $region21
    $region20: #{hilbert_envelope.1} parent=1 // pred_region
      _
    $region21: #{hilbert_envelope.1} parent=1 // pred_fallthru
      _
    %311 = vsyncpa [#allocation3], 1

</llo_original>
